<compile_context>
chip_gen: v7x
topology: tpu7x:2x2x1
jax: 0.10.0
libtpu: 0.0.40
codegen_flags: <defaults>
</compile_context>

<pallas_src>
import functools

import jax
import jax.numpy as jnp
from jax.experimental import pallas as pl
from jax.experimental.pallas import tpu as pltpu

FEAT_DIM = 32          # STATE_DIM
HEAD_DIM = 32
NUM_ACTIONS = 6
NUM_STEPSIZES = 4
NUM_NOPS = 1
ACTION_DIM = NUM_ACTIONS * NUM_STEPSIZES + NUM_NOPS  # 25

LANES = 128            # one full vreg lane width; every fused matmul is N=128

# ---- column layout of the fused layers (all within the 128-lane width) ----
# layer-1 output h:   [ h_t (64) | h_r (64) ]
# layer-2 output z:   [ e_t (32) | e_r (32) | 0 ... ]
# layer-3 output head:[ logits_t (25) | logits_r (25) | pre_e_v (32) | 0 ... ]
COL_EV = 2 * ACTION_DIM          # 50
COL_VAL = COL_EV + HEAD_DIM      # 82  (value lands in this single column)

# ---- row layout of the packed parameter slab (every segment starts 8-aligned) ----
ROW_W1 = 0                       # [32, 128]   W1 = [wt1 | wr1]
ROW_B1 = 32                      # row 32      b1 = [bt1 | br1]
ROW_W2 = 40                      # [128, 128]  block-diag(wt2, wr2), cols 64:128 zero
ROW_B2 = 168                     # row 168
ROW_W3 = 176                     # [128, 128]  [wat | war | wv1_split | 0], rows 64:128 zero
ROW_B3 = 304                     # row 304
ROW_WV = 312                     # [128, 128]  wv2 at [COL_EV:COL_EV+32, COL_VAL], rest zero
ROW_BV = 440                     # row 440     bv2 at column COL_VAL
R_TOTAL = 448

MAX_TILE_B = 256                 # batch tile (multiple of 8); amortizes per-step overhead


def _actor_critic_kernel(state_ref, params_ref, out_ref):
    x = state_ref[...]                                          # [tb, 32]

    w1 = params_ref[ROW_W1:ROW_W1 + FEAT_DIM, :]                # [32, 128]
    b1 = params_ref[ROW_B1:ROW_B1 + 1, :]                       # [1, 128]
    w2 = params_ref[ROW_W2:ROW_W2 + LANES, :]                   # [128, 128]
    b2 = params_ref[ROW_B2:ROW_B2 + 1, :]
    w3 = params_ref[ROW_W3:ROW_W3 + LANES, :]                   # [128, 128]
    b3 = params_ref[ROW_B3:ROW_B3 + 1, :]
    wv = params_ref[ROW_WV:ROW_WV + LANES, :]                   # [128, 128]
    bv = params_ref[ROW_BV:ROW_BV + 1, :]

    # layer 1: both branches in one 128-lane matmul  -> [h_t | h_r]
    h = jnp.maximum(jnp.dot(x, w1, preferred_element_type=jnp.float32) + b1, 0.0)
    # layer 2: block-diagonal fused matmul            -> [e_t | e_r | 0]
    z = jnp.maximum(jnp.dot(h, w2, preferred_element_type=jnp.float32) + b2, 0.0)
    # layer 3: both action heads + first value layer  -> [logits_t | logits_r | pre_e_v | 0]
    head = jnp.dot(z, w3, preferred_element_type=jnp.float32) + b3
    # value head: relu(head) @ wv only picks up the pre_e_v columns (other rows of wv are
    # exact zeros), landing the scalar value in column COL_VAL; head is zero there, so a
    # single add splices it into the output slab.
    val = jnp.dot(jnp.maximum(head, 0.0), wv, preferred_element_type=jnp.float32) + bv

    out_ref[...] = head + val                                   # [tb, 128] lane-dense store


def _round_up(x, m):
    return ((x + m - 1) // m) * m


@jax.jit
def actor_critic_head(state, packed_params):
    """state: [B, FEAT_DIM] f32 -> ([logits_t [B,25], logits_r [B,25]], value [B,1])."""
    B = state.shape[0]
    tb = min(_round_up(B, 8), MAX_TILE_B)
    Bp = _round_up(B, tb)
    if Bp != B:
        state = jnp.pad(state, ((0, Bp - B), (0, 0)))

    out = pl.pallas_call(
        _actor_critic_kernel,
        grid=(Bp // tb,),
        in_specs=[
            pl.BlockSpec((tb, FEAT_DIM), lambda i: (i, 0)),        # batch-tiled state
            pl.BlockSpec((R_TOTAL, LANES), lambda i: (0, 0)),      # params stay resident
        ],
        out_specs=pl.BlockSpec((tb, LANES), lambda i: (i, 0)),
        out_shape=jax.ShapeDtypeStruct((Bp, LANES), jnp.float32),
        compiler_params=pltpu.CompilerParams(
            dimension_semantics=("parallel",)),                    # shard batch tiles across TCs
    )(state, packed_params)

    logits_t = out[:B, 0:ACTION_DIM]
    logits_r = out[:B, ACTION_DIM:2 * ACTION_DIM]
    value = out[:B, COL_VAL:COL_VAL + 1]
    return [logits_t, logits_r], value


def init_params(key):
    """Deterministic synthetic init. Weights stored as [in_dim, out_dim] (transposed relative
    to torch.nn.Linear's [out, in]) so the math is x @ W + b."""
    ks = jax.random.split(key, 16)
    s = 0.1

    def w(k, i, o):
        return (s * jax.random.normal(k, (i, o))).astype(jnp.float32)

    def b(k, o):
        return (s * jax.random.normal(k, (1, o))).astype(jnp.float32)

    F, H, A = FEAT_DIM, HEAD_DIM, ACTION_DIM
    return {
        # emb_t:   Linear(F, 2H) -> ReLU -> Linear(2H, H) -> ReLU ; action_t: Linear(H, A)
        "wt1": w(ks[0], F, 2 * H), "bt1": b(ks[1], 2 * H),
        "wt2": w(ks[2], 2 * H, H), "bt2": b(ks[3], H),
        "wat": w(ks[4], H, A),     "bat": b(ks[5], A),
        # emb_r / action_r
        "wr1": w(ks[6], F, 2 * H), "br1": b(ks[7], 2 * H),
        "wr2": w(ks[8], 2 * H, H), "br2": b(ks[9], H),
        "war": w(ks[10], H, A),    "bar": b(ks[11], A),
        # emb_v: Linear(2H, H) -> ReLU ; value: Linear(H, 1)
        "wv1": w(ks[12], 2 * H, H), "bv1": b(ks[13], H),
        "wv2": w(ks[14], H, 1),     "bv2": b(ks[15], 1),
    }


def pack_params(p):
    """Build the single [R_TOTAL, 128] f32 parameter slab (exact zeros in the padding /
    off-diagonal blocks, so fused results are numerically identical to the unfused math)."""
    F, H, A = FEAT_DIM, HEAD_DIM, ACTION_DIM
    W = jnp.zeros((R_TOTAL, LANES), jnp.float32)

    # layer 1: W1 = [wt1 | wr1], b1 = [bt1 | br1]
    W = W.at[ROW_W1:ROW_W1 + F, 0:2 * H].set(p["wt1"])
    W = W.at[ROW_W1:ROW_W1 + F, 2 * H:4 * H].set(p["wr1"])
    W = W.at[ROW_B1, 0:2 * H].set(p["bt1"][0])
    W = W.at[ROW_B1, 2 * H:4 * H].set(p["br1"][0])

    # layer 2: block-diagonal(wt2, wr2), padded to 128 columns
    W = W.at[ROW_W2:ROW_W2 + 2 * H, 0:H].set(p["wt2"])
    W = W.at[ROW_W2 + 2 * H:ROW_W2 + 4 * H, H:2 * H].set(p["wr2"])
    W = W.at[ROW_B2, 0:H].set(p["bt2"][0])
    W = W.at[ROW_B2, H:2 * H].set(p["br2"][0])

    # layer 3: action heads + split value layer-1 (cat(e_t,e_r) @ wv1)
    W = W.at[ROW_W3:ROW_W3 + H, 0:A].set(p["wat"])
    W = W.at[ROW_W3 + H:ROW_W3 + 2 * H, A:2 * A].set(p["war"])
    W = W.at[ROW_W3:ROW_W3 + H, COL_EV:COL_EV + H].set(p["wv1"][0:H])
    W = W.at[ROW_W3 + H:ROW_W3 + 2 * H, COL_EV:COL_EV + H].set(p["wv1"][H:2 * H])
    W = W.at[ROW_B3, 0:A].set(p["bat"][0])
    W = W.at[ROW_B3, A:2 * A].set(p["bar"][0])
    W = W.at[ROW_B3, COL_EV:COL_EV + H].set(p["bv1"][0])

    # value layer 2: wv2 routed from the pre_e_v columns into column COL_VAL
    W = W.at[ROW_WV + COL_EV:ROW_WV + COL_EV + H, COL_VAL:COL_VAL + 1].set(p["wv2"])
    W = W.at[ROW_BV, COL_VAL].set(p["bv2"][0, 0])
    return W


def _reference(state, p):
    """Plain-JAX reference mirroring the PyTorch forward."""
    relu = lambda x: jnp.maximum(x, 0.0)
    e_t = relu(relu(state @ p["wt1"] + p["bt1"]) @ p["wt2"] + p["bt2"])
    e_r = relu(relu(state @ p["wr1"] + p["br1"]) @ p["wr2"] + p["br2"])
    lt = e_t @ p["wat"] + p["bat"]
    lr = e_r @ p["war"] + p["bar"]
    sa = jnp.concatenate([e_t, e_r], axis=1)
    e_v = relu(sa @ p["wv1"] + p["bv1"])
    v = e_v @ p["wv2"] + p["bv2"]
    return [lt, lr], v


def _check(state, params, packed):
    B = state.shape[0]
    (logits_t, logits_r), value = actor_critic_head(state, packed)
    jax.block_until_ready((logits_t, logits_r, value))
    (ref_lt, ref_lr), ref_v = _reference(state, params)
    assert logits_t.shape == (B, ACTION_DIM)
    assert logits_r.shape == (B, ACTION_DIM)
    assert value.shape == (B, 1)
    assert jnp.allclose(logits_t, ref_lt, atol=2e-5, rtol=2e-5)
    assert jnp.allclose(logits_r, ref_lr, atol=2e-5, rtol=2e-5)
    assert jnp.allclose(value, ref_v, atol=2e-5, rtol=2e-5)


if __name__ == "__main__":
    key = jax.random.PRNGKey(0)
    k_state, k_state2, k_params = jax.random.split(key, 3)

    params = init_params(k_params)
    packed = pack_params(params)

    # small batch: single grid point
    state_small = jax.random.normal(k_state, (8, FEAT_DIM), dtype=jnp.float32)
    _check(state_small, params, packed)

    # larger (ragged) batch: exercises padding + multi-tile batch grid + parallel semantics
    state_big = jax.random.normal(k_state2, (300, FEAT_DIM), dtype=jnp.float32)
    _check(state_big, params, packed)

    print("KERNEL_OK")
</pallas_src>

<mosaic_0001>
module attributes {stable_mosaic.version = 11 : i64} {
  func.func @_actor_critic_kernel(%arg0: i32, %arg1: memref<8x32xf32, #tpu.memory_space<vmem>>, %arg2: memref<448x128xf32, #tpu.memory_space<vmem>>, %arg3: memref<8x128xf32, #tpu.memory_space<vmem>>) attributes {dimension_semantics = [#tpu.dimension_semantics<parallel>], iteration_bounds = array<i64: 1>, scalar_prefetch = 0 : i64, scratch_operands = 0 : i64, tpu.core_type = #tpu.core_type<tc>, window_params = [{transform_indices = @transform_0, window_bounds = array<i64: 8, 32>}, {pipeline_mode = #tpu.pipeline_mode<synchronous>, transform_indices = @transform_1, window_bounds = array<i64: 448, 128>}, {transform_indices = @transform_2, window_bounds = array<i64: 8, 128>}]} {
    %c0 = arith.constant 0 : index
    %c0_0 = arith.constant 0 : index
    %0 = vector.load %arg1[%c0, %c0_0] : memref<8x32xf32, #tpu.memory_space<vmem>>, vector<8x32xf32>
    %c0_1 = arith.constant 0 : index
    %c0_2 = arith.constant 0 : index
    %1 = vector.load %arg2[%c0_1, %c0_2] : memref<448x128xf32, #tpu.memory_space<vmem>>, vector<32x128xf32>
    %c32 = arith.constant 32 : index
    %c0_3 = arith.constant 0 : index
    %2 = vector.load %arg2[%c32, %c0_3] : memref<448x128xf32, #tpu.memory_space<vmem>>, vector<1x128xf32>
    %c40 = arith.constant 40 : index
    %c0_4 = arith.constant 0 : index
    %3 = vector.load %arg2[%c40, %c0_4] : memref<448x128xf32, #tpu.memory_space<vmem>>, vector<128x128xf32>
    %c168 = arith.constant 168 : index
    %c0_5 = arith.constant 0 : index
    %4 = vector.load %arg2[%c168, %c0_5] : memref<448x128xf32, #tpu.memory_space<vmem>>, vector<1x128xf32>
    %c176 = arith.constant 176 : index
    %c0_6 = arith.constant 0 : index
    %5 = vector.load %arg2[%c176, %c0_6] : memref<448x128xf32, #tpu.memory_space<vmem>>, vector<128x128xf32>
    %c304 = arith.constant 304 : index
    %c0_7 = arith.constant 0 : index
    %6 = vector.load %arg2[%c304, %c0_7] : memref<448x128xf32, #tpu.memory_space<vmem>>, vector<1x128xf32>
    %c312 = arith.constant 312 : index
    %c0_8 = arith.constant 0 : index
    %7 = vector.load %arg2[%c312, %c0_8] : memref<448x128xf32, #tpu.memory_space<vmem>>, vector<128x128xf32>
    %c440 = arith.constant 440 : index
    %c0_9 = arith.constant 0 : index
    %8 = vector.load %arg2[%c440, %c0_9] : memref<448x128xf32, #tpu.memory_space<vmem>>, vector<1x128xf32>
    %cst = arith.constant dense<0.000000e+00> : vector<8x128xf32>
    %9 = tpu.matmul %0, %1, %cst {dimension_numbers = #tpu.dot_dimension_numbers<[1], [0], [0], [1], [0, 0, 1, 1], [], []>} : vector<8x32xf32>, vector<32x128xf32>, vector<8x128xf32> -> vector<8x128xf32>
    %10 = vector.broadcast %2 : vector<1x128xf32> to vector<8x128xf32>
    %11 = arith.addf %9, %10 : vector<8x128xf32>
    %cst_10 = arith.constant 0.000000e+00 : f32
    %12 = vector.broadcast %cst_10 : f32 to vector<8x128xf32>
    %13 = arith.maximumf %11, %12 : vector<8x128xf32>
    %cst_11 = arith.constant dense<0.000000e+00> : vector<8x128xf32>
    %14 = tpu.matmul %13, %3, %cst_11 {dimension_numbers = #tpu.dot_dimension_numbers<[1], [0], [0], [1], [0, 0, 1, 1], [], []>} : vector<8x128xf32>, vector<128x128xf32>, vector<8x128xf32> -> vector<8x128xf32>
    %15 = vector.broadcast %4 : vector<1x128xf32> to vector<8x128xf32>
    %16 = arith.addf %14, %15 : vector<8x128xf32>
    %cst_12 = arith.constant 0.000000e+00 : f32
    %17 = vector.broadcast %cst_12 : f32 to vector<8x128xf32>
    %18 = arith.maximumf %16, %17 : vector<8x128xf32>
    %cst_13 = arith.constant dense<0.000000e+00> : vector<8x128xf32>
    %19 = tpu.matmul %18, %5, %cst_13 {dimension_numbers = #tpu.dot_dimension_numbers<[1], [0], [0], [1], [0, 0, 1, 1], [], []>} : vector<8x128xf32>, vector<128x128xf32>, vector<8x128xf32> -> vector<8x128xf32>
    %20 = vector.broadcast %6 : vector<1x128xf32> to vector<8x128xf32>
    %21 = arith.addf %19, %20 : vector<8x128xf32>
    %cst_14 = arith.constant 0.000000e+00 : f32
    %22 = vector.broadcast %cst_14 : f32 to vector<8x128xf32>
    %23 = arith.maximumf %21, %22 : vector<8x128xf32>
    %cst_15 = arith.constant dense<0.000000e+00> : vector<8x128xf32>
    %24 = tpu.matmul %23, %7, %cst_15 {dimension_numbers = #tpu.dot_dimension_numbers<[1], [0], [0], [1], [0, 0, 1, 1], [], []>} : vector<8x128xf32>, vector<128x128xf32>, vector<8x128xf32> -> vector<8x128xf32>
    %25 = vector.broadcast %8 : vector<1x128xf32> to vector<8x128xf32>
    %26 = arith.addf %24, %25 : vector<8x128xf32>
    %27 = arith.addf %21, %26 : vector<8x128xf32>
    %c0_16 = arith.constant 0 : index
    %c0_17 = arith.constant 0 : index
    %28 = vector.load %arg3[%c0_16, %c0_17] : memref<8x128xf32, #tpu.memory_space<vmem>>, vector<8x128xf32>
    tpu.vector_store %arg3[%c0_16, %c0_17], %27 {strides = array<i32>} : memref<8x128xf32, #tpu.memory_space<vmem>>, vector<8x128xf32>,
    return
  }
  func.func @transform_0(%arg0: i32) -> (i32, i32) {
    %c0_i32 = arith.constant 0 : i32
    %c0_i32_0 = arith.constant 0 : i32
    return %arg0, %c0_i32 : i32, i32
  }
  func.func @transform_1(%arg0: i32) -> (i32, i32) {
    %c0_i32 = arith.constant 0 : i32
    %c0_i32_0 = arith.constant 0 : i32
    %c0_i32_1 = arith.constant 0 : i32
    return %c0_i32, %c0_i32_0 : i32, i32
  }
  func.func @transform_2(%arg0: i32) -> (i32, i32) {
    %c0_i32 = arith.constant 0 : i32
    %c0_i32_0 = arith.constant 0 : i32
    return %arg0, %c0_i32 : i32, i32
  }
}

</mosaic_0001>

<llo_original>
// kernel: actor_critic_head.1
$region0: #{actor_critic_head.1}
  #allocation0 [shape = 'u32[]', space=smem, size = 0x4, offset = 0x4, fixed_abs, tag = 'smem constant byte address 0x4 - core index']
  #allocation1 [shape = 'u32[144,128]{1,0:T(1,128)}', space=vmem, size = 0x12000, scoped, tag = 'internal scratch']
  %s0 = inlined_call_operand.hbm [shape: f32[8,32], index: 0, kind: input, shape index: {}]
  %s1 = inlined_call_operand.hbm [shape: f32[448,128], index: 1, kind: input, shape index: {}]
  %s2 = inlined_call_operand.vmem [shape: f32[8,128], index: 2, kind: output, shape index: {}]
  %s3 = sld [smem:[#allocation0]]
  $region26: #{actor_critic_head.1} parent=0
    _
  %s5 = ssub.s32 1, %s3
  %s6 = scalar_select 0, %s5, %s3
  $region1: #{actor_critic_head.1} parent=0
    #allocation2 [shape = 'u8[4096]{0}', space=vmem, size = 0x1000, scoped, tag = 'input window, operand 0, single buffered']
    #allocation3 [shape = 's32[1]{0}', space=sflag, size = 0x4, scoped, tag = 'scoped memory for actor_critic_head.1']
    #allocation4 [shape = 'u8[229376]{0}', space=vmem, size = 0x38000, scoped, tag = 'input window, operand 1, single buffered']
    #allocation5 [shape = 's32[1]{0}', space=sflag, size = 0x4, scoped, tag = 'scoped memory for actor_critic_head.1']
    %7 = vsyncpa [#allocation3], 0
    %8 = vsyncpa [#allocation5], 0
    // Predicated region
    $region2: #{actor_critic_head.1} parent=1 // pred_check
      _
    $region3: #{actor_critic_head.1} parent=1 // pred_check_branch
      %10 = sbr.rel (0) target = $region5
    $region4: #{actor_critic_head.1} parent=1 // pred_region
      %s12 = ssub.s32 128, 128
      %13 = vsyncadd [#allocation3], %s12
      %s15 = sshll.u32 [#allocation2], 4
      %s16 = int_to_ptr.vmem [resolvable:$true] %s15
      %18 = dma.hbm_to_vmem [thread:$0]  %s0, 128, %s16, [#allocation3]
    $region5: #{actor_critic_head.1} parent=1 // pred_fallthru
      _
    // Predicated region
    $region6: #{actor_critic_head.1} parent=1 // pred_check
      _
    $region7: #{actor_critic_head.1} parent=1 // pred_check_branch
      %20 = sbr.rel (0) target = $region9
    $region8: #{actor_critic_head.1} parent=1 // pred_region
      %s22 = ssub.s32 7168, 7168
      %23 = vsyncadd [#allocation5], %s22
      %s24 = sshll.u32 [#allocation4], 4
      %s25 = int_to_ptr.vmem [resolvable:$true] %s24
      %30 = dma.hbm_to_vmem [thread:$0]  %s1, 7168, %s25, [#allocation5], 128, 128, 8
    $region9: #{actor_critic_head.1} parent=1 // pred_fallthru
      _
    // Predicated region
    $region10: #{actor_critic_head.1} parent=1 // pred_check
      _
    $region11: #{actor_critic_head.1} parent=1 // pred_check_branch
      %32 = sbr.rel (0) target = $region13
    $region12: #{actor_critic_head.1} parent=1 // pred_region
      %33 = dma.done [#allocation3], 128
    $region13: #{actor_critic_head.1} parent=1 // pred_fallthru
      _
    // Predicated region
    $region14: #{actor_critic_head.1} parent=1 // pred_check
      _
    $region15: #{actor_critic_head.1} parent=1 // pred_check_branch
      %35 = sbr.rel (0) target = $region17
    $region16: #{actor_critic_head.1} parent=1 // pred_region
      %36 = dma.done [#allocation5], 7168
    $region17: #{actor_critic_head.1} parent=1 // pred_fallthru
      _
    %v37 = vld [vmem:[#allocation2] sm:$0xff]
    %v38 = vld [vmem:[#allocation4] sm:$0xff]
    %v39 = vld [vmem:[#allocation4 + $0x8] sm:$0xff]
    %v40 = vld [vmem:[#allocation4 + $0x10] sm:$0xff]
    %v41 = vld [vmem:[#allocation4 + $0x18] sm:$0xff]
    %v42 = vld [vmem:[#allocation4 + $0x20] sm:$0x1]
    %v43 = vld [vmem:[#allocation4 + $0x28] sm:$0xff]
    %v44 = vld [vmem:[#allocation4 + $0x30] sm:$0xff]
    %v45 = vld [vmem:[#allocation4 + $0x38] sm:$0xff]
    %v46 = vld [vmem:[#allocation4 + $0x40] sm:$0xff]
    %v47 = vld [vmem:[#allocation4 + $0x48] sm:$0xff]
    %v48 = vld [vmem:[#allocation4 + $0x50] sm:$0xff]
    %v49 = vld [vmem:[#allocation4 + $0x58] sm:$0xff]
    %v50 = vld [vmem:[#allocation4 + $0x60] sm:$0xff]
    %v51 = vld [vmem:[#allocation4 + $0x68] sm:$0xff]
    %v52 = vld [vmem:[#allocation4 + $0x70] sm:$0xff]
    %v53 = vld [vmem:[#allocation4 + $0x78] sm:$0xff]
    %v54 = vld [vmem:[#allocation4 + $0x80] sm:$0xff]
    %v55 = vld [vmem:[#allocation4 + $0x88] sm:$0xff]
    %v56 = vld [vmem:[#allocation4 + $0x90] sm:$0xff]
    %v57 = vld [vmem:[#allocation4 + $0x98] sm:$0xff]
    %v58 = vld [vmem:[#allocation4 + $0xa0] sm:$0xff]
    %v59 = vld [vmem:[#allocation4 + $0xa8] sm:$0x1]
    %v60 = vld [vmem:[#allocation4 + $0xb0] sm:$0xff]
    %v61 = vld [vmem:[#allocation4 + $0xb8] sm:$0xff]
    %v62 = vld [vmem:[#allocation4 + $0xc0] sm:$0xff]
    %v63 = vld [vmem:[#allocation4 + $0xc8] sm:$0xff]
    %v64 = vld [vmem:[#allocation4 + $0xd0] sm:$0xff]
    %v65 = vld [vmem:[#allocation4 + $0xd8] sm:$0xff]
    %v66 = vld [vmem:[#allocation4 + $0xe0] sm:$0xff]
    %v67 = vld [vmem:[#allocation4 + $0xe8] sm:$0xff]
    %v68 = vld [vmem:[#allocation4 + $0xf0] sm:$0xff]
    %v69 = vld [vmem:[#allocation4 + $0xf8] sm:$0xff]
    %v70 = vld [vmem:[#allocation4 + $0x100] sm:$0xff]
    %v71 = vld [vmem:[#allocation4 + $0x108] sm:$0xff]
    %v72 = vld [vmem:[#allocation4 + $0x110] sm:$0xff]
    %v73 = vld [vmem:[#allocation4 + $0x118] sm:$0xff]
    %v74 = vld [vmem:[#allocation4 + $0x120] sm:$0xff]
    %v75 = vld [vmem:[#allocation4 + $0x128] sm:$0xff]
    %v76 = vld [vmem:[#allocation4 + $0x130] sm:$0x1]
    %v77 = vld [vmem:[#allocation4 + $0x138] sm:$0xff]
    %v78 = vld [vmem:[#allocation4 + $0x140] sm:$0xff]
    %v79 = vld [vmem:[#allocation4 + $0x148] sm:$0xff]
    %v80 = vld [vmem:[#allocation4 + $0x150] sm:$0xff]
    %v81 = vld [vmem:[#allocation4 + $0x158] sm:$0xff]
    %v82 = vld [vmem:[#allocation4 + $0x160] sm:$0xff]
    %v83 = vld [vmem:[#allocation4 + $0x168] sm:$0xff]
    %v84 = vld [vmem:[#allocation4 + $0x170] sm:$0xff]
    %v85 = vld [vmem:[#allocation4 + $0x178] sm:$0xff]
    %v86 = vld [vmem:[#allocation4 + $0x180] sm:$0xff]
    %v87 = vld [vmem:[#allocation4 + $0x188] sm:$0xff]
    %v88 = vld [vmem:[#allocation4 + $0x190] sm:$0xff]
    %v89 = vld [vmem:[#allocation4 + $0x198] sm:$0xff]
    %v90 = vld [vmem:[#allocation4 + $0x1a0] sm:$0xff]
    %v91 = vld [vmem:[#allocation4 + $0x1a8] sm:$0xff]
    %v92 = vld [vmem:[#allocation4 + $0x1b0] sm:$0xff]
    %v93 = vld [vmem:[#allocation4 + $0x1b8] sm:$0x1]
    %v94 = vlaneseq
    %v95 = vshrl.u32 %v94, 7
    %v96 = vsub.s32 0, %v95
    %v97 = vrot.slane %v42, %v96
    %vm98 = vcmask 261120
    %v100 = vsel %vm98, %v37, 0
    %102 = vmatprep.subr.mxu0 0.0
    %103 = vmatpush1.msra.mxu0 %v38
    %104 = vmatprep.subr.mxu0 0.0
    %105 = vmatpush1.msra.mxu0 %v39
    %106 = vmatprep.subr.mxu0 0.0
    %107 = vmatpush1.msra.mxu0 %v40
    %108 = vmatprep.subr.mxu0 0.0
    %109 = vmatpush1.msra.mxu0 %v41
    %110 = vmatprep.subr.mxu0 0.0
    %111 = vmatpush1.msra.mxu0 0.0
    %112 = vmatprep.subr.mxu0 0.0
    %113 = vmatpush1.msra.mxu0 0.0
    %114 = vmatprep.subr.mxu0 0.0
    %115 = vmatpush1.msra.mxu0 0.0
    %116 = vmatprep.subr.mxu0 0.0
    %117 = vmatpush1.msra.mxu0 0.0
    %118 = vmatprep.subr.mxu0 0.0
    %119 = vmatpush1.msra.mxu0 0.0
    %120 = vmatprep.subr.mxu0 0.0
    %121 = vmatpush1.msra.mxu0 0.0
    %122 = vmatprep.subr.mxu0 0.0
    %123 = vmatpush1.msra.mxu0 0.0
    %124 = vmatprep.subr.mxu0 0.0
    %125 = vmatpush1.msra.mxu0 0.0
    %126 = vmatprep.subr.mxu0 0.0
    %127 = vmatpush1.msra.mxu0 0.0
    %128 = vmatprep.subr.mxu0 0.0
    %129 = vmatpush1.msra.mxu0 0.0
    %130 = vmatprep.subr.mxu0 0.0
    %131 = vmatpush1.msra.mxu0 0.0
    %132 = vmatprep.subr.mxu0 0.0
    %133 = vmatpush1.msra.mxu0 0.0
    %134 = vmatprep.subr.mxu0 0.0
    %135 = vmatpush1.msra.mxu0 0.0
    %136 = vmatprep.subr.mxu0 0.0
    %137 = vmatpush1.msra.mxu0 0.0
    %138 = vmatprep.subr.mxu0 0.0
    %139 = vmatpush1.msra.mxu0 0.0
    %140 = vmatprep.subr.mxu0 0.0
    %141 = vmatpush1.msra.mxu0 0.0
    %142 = vmatprep.subr.mxu0 0.0
    %143 = vmatpush1.msra.mxu0 0.0
    %144 = vmatprep.subr.mxu0 0.0
    %145 = vmatpush1.msra.mxu0 0.0
    %146 = vmatprep.subr.mxu0 0.0
    %147 = vmatpush1.msra.mxu0 0.0
    %148 = vmatprep.subr.mxu0 0.0
    %149 = vmatpush1.msra.mxu0 0.0
    %150 = vmatprep.subr.mxu0 0.0
    %151 = vmatpush1.msra.mxu0 0.0
    %152 = vmatprep.subr.mxu0 0.0
    %153 = vmatpush1.msra.mxu0 0.0
    %154 = vmatprep.subr.mxu0 0.0
    %155 = vmatpush1.msra.mxu0 0.0
    %156 = vmatprep.subr.mxu0 0.0
    %157 = vmatpush1.msra.mxu0 0.0
    %158 = vmatprep.subr.mxu0 0.0
    %159 = vmatpush1.msra.mxu0 0.0
    %160 = vmatprep.subr.mxu0 0.0
    %161 = vmatpush1.msra.mxu0 0.0
    %162 = vmatprep.subr.mxu0 0.0
    %163 = vmatpush1.msra.mxu0 0.0
    %164 = vmatprep.subr.mxu0 0.0
    %165 = vmatpush1.msra.mxu0 0.0
    %166 = vmatprep.mubr.f32.mxu0 0.0
    %167 = vmatmul.mubr.f32.gmra.mrb[0].mxu0 %v100
    %v168 = vpop.f32.mrb[0].mxu0
    %v169 = vadd.f32 %v97, %v168
    %v170 = vpop.f32.mrb[0].mxu0
    %171 = vdwg.mxu0
    %v172 = vmax.f32 %v169, 0.0
    %v173 = vlaneseq
    %v174 = vshrl.u32 %v173, 7
    %v175 = vsub.s32 0, %v174
    %v176 = vrot.slane %v59, %v175
    %177 = vmatprep.subr.mxu0 0.0
    %178 = vmatpush1.msra.mxu0 %v43
    %179 = vmatprep.subr.mxu0 0.0
    %180 = vmatpush1.msra.mxu0 %v44
    %181 = vmatprep.subr.mxu0 0.0
    %182 = vmatpush1.msra.mxu0 %v45
    %183 = vmatprep.subr.mxu0 0.0
    %184 = vmatpush1.msra.mxu0 %v46
    %185 = vmatprep.subr.mxu0 0.0
    %186 = vmatpush1.msra.mxu0 %v47
    %187 = vmatprep.subr.mxu0 0.0
    %188 = vmatpush1.msra.mxu0 %v48
    %189 = vmatprep.subr.mxu0 0.0
    %190 = vmatpush1.msra.mxu0 %v49
    %191 = vmatprep.subr.mxu0 0.0
    %192 = vmatpush1.msra.mxu0 %v50
    %193 = vmatprep.subr.mxu0 0.0
    %194 = vmatpush1.msra.mxu0 %v51
    %195 = vmatprep.subr.mxu0 0.0
    %196 = vmatpush1.msra.mxu0 %v52
    %197 = vmatprep.subr.mxu0 0.0
    %198 = vmatpush1.msra.mxu0 %v53
    %199 = vmatprep.subr.mxu0 0.0
    %200 = vmatpush1.msra.mxu0 %v54
    %201 = vmatprep.subr.mxu0 0.0
    %202 = vmatpush1.msra.mxu0 %v55
    %203 = vmatprep.subr.mxu0 0.0
    %204 = vmatpush1.msra.mxu0 %v56
    %205 = vmatprep.subr.mxu0 0.0
    %206 = vmatpush1.msra.mxu0 %v57
    %207 = vmatprep.subr.mxu0 0.0
    %208 = vmatpush1.msra.mxu0 %v58
    %209 = vmatprep.subr.mxu0 0.0
    %210 = vmatpush1.msra.mxu0 0.0
    %211 = vmatprep.subr.mxu0 0.0
    %212 = vmatpush1.msra.mxu0 0.0
    %213 = vmatprep.subr.mxu0 0.0
    %214 = vmatpush1.msra.mxu0 0.0
    %215 = vmatprep.subr.mxu0 0.0
    %216 = vmatpush1.msra.mxu0 0.0
    %217 = vmatprep.subr.mxu0 0.0
    %218 = vmatpush1.msra.mxu0 0.0
    %219 = vmatprep.subr.mxu0 0.0
    %220 = vmatpush1.msra.mxu0 0.0
    %221 = vmatprep.subr.mxu0 0.0
    %222 = vmatpush1.msra.mxu0 0.0
    %223 = vmatprep.subr.mxu0 0.0
    %224 = vmatpush1.msra.mxu0 0.0
    %225 = vmatprep.subr.mxu0 0.0
    %226 = vmatpush1.msra.mxu0 0.0
    %227 = vmatprep.subr.mxu0 0.0
    %228 = vmatpush1.msra.mxu0 0.0
    %229 = vmatprep.subr.mxu0 0.0
    %230 = vmatpush1.msra.mxu0 0.0
    %231 = vmatprep.subr.mxu0 0.0
    %232 = vmatpush1.msra.mxu0 0.0
    %233 = vmatprep.subr.mxu0 0.0
    %234 = vmatpush1.msra.mxu0 0.0
    %235 = vmatprep.subr.mxu0 0.0
    %236 = vmatpush1.msra.mxu0 0.0
    %237 = vmatprep.subr.mxu0 0.0
    %238 = vmatpush1.msra.mxu0 0.0
    %239 = vmatprep.subr.mxu0 0.0
    %240 = vmatpush1.msra.mxu0 0.0
    %241 = vmatprep.mubr.f32.mxu0 0.0
    %242 = vmatmul.mubr.f32.gmra.mrb[0].mxu0 %v172
    %v243 = vpop.f32.mrb[0].mxu0
    %v244 = vadd.f32 %v176, %v243
    %v245 = vpop.f32.mrb[0].mxu0
    %246 = vdwg.mxu0
    %v247 = vmax.f32 %v244, 0.0
    %v248 = vlaneseq
    %v249 = vshrl.u32 %v248, 7
    %v250 = vsub.s32 0, %v249
    %v251 = vrot.slane %v76, %v250
    %252 = vmatprep.subr.mxu0 0.0
    %253 = vmatpush1.msra.mxu0 %v60
    %254 = vmatprep.subr.mxu0 0.0
    %255 = vmatpush1.msra.mxu0 %v61
    %256 = vmatprep.subr.mxu0 0.0
    %257 = vmatpush1.msra.mxu0 %v62
    %258 = vmatprep.subr.mxu0 0.0
    %259 = vmatpush1.msra.mxu0 %v63
    %260 = vmatprep.subr.mxu0 0.0
    %261 = vmatpush1.msra.mxu0 %v64
    %262 = vmatprep.subr.mxu0 0.0
    %263 = vmatpush1.msra.mxu0 %v65
    %264 = vmatprep.subr.mxu0 0.0
    %265 = vmatpush1.msra.mxu0 %v66
    %266 = vmatprep.subr.mxu0 0.0
    %267 = vmatpush1.msra.mxu0 %v67
    %268 = vmatprep.subr.mxu0 0.0
    %269 = vmatpush1.msra.mxu0 %v68
    %270 = vmatprep.subr.mxu0 0.0
    %271 = vmatpush1.msra.mxu0 %v69
    %272 = vmatprep.subr.mxu0 0.0
    %273 = vmatpush1.msra.mxu0 %v70
    %274 = vmatprep.subr.mxu0 0.0
    %275 = vmatpush1.msra.mxu0 %v71
    %276 = vmatprep.subr.mxu0 0.0
    %277 = vmatpush1.msra.mxu0 %v72
    %278 = vmatprep.subr.mxu0 0.0
    %279 = vmatpush1.msra.mxu0 %v73
    %280 = vmatprep.subr.mxu0 0.0
    %281 = vmatpush1.msra.mxu0 %v74
    %282 = vmatprep.subr.mxu0 0.0
    %283 = vmatpush1.msra.mxu0 %v75
    %284 = vmatprep.subr.mxu0 0.0
    %285 = vmatpush1.msra.mxu0 0.0
    %286 = vmatprep.subr.mxu0 0.0
    %287 = vmatpush1.msra.mxu0 0.0
    %288 = vmatprep.subr.mxu0 0.0
    %289 = vmatpush1.msra.mxu0 0.0
    %290 = vmatprep.subr.mxu0 0.0
    %291 = vmatpush1.msra.mxu0 0.0
    %292 = vmatprep.subr.mxu0 0.0
    %293 = vmatpush1.msra.mxu0 0.0
    %294 = vmatprep.subr.mxu0 0.0
    %295 = vmatpush1.msra.mxu0 0.0
    %296 = vmatprep.subr.mxu0 0.0
    %297 = vmatpush1.msra.mxu0 0.0
    %298 = vmatprep.subr.mxu0 0.0
    %299 = vmatpush1.msra.mxu0 0.0
    %300 = vmatprep.subr.mxu0 0.0
    %301 = vmatpush1.msra.mxu0 0.0
    %302 = vmatprep.subr.mxu0 0.0
    %303 = vmatpush1.msra.mxu0 0.0
    %304 = vmatprep.subr.mxu0 0.0
    %305 = vmatpush1.msra.mxu0 0.0
    %306 = vmatprep.subr.mxu0 0.0
    %307 = vmatpush1.msra.mxu0 0.0
    %308 = vmatprep.subr.mxu0 0.0
    %309 = vmatpush1.msra.mxu0 0.0
    %310 = vmatprep.subr.mxu0 0.0
    %311 = vmatpush1.msra.mxu0 0.0
    %312 = vmatprep.subr.mxu0 0.0
    %313 = vmatpush1.msra.mxu0 0.0
    %314 = vmatprep.subr.mxu0 0.0
    %315 = vmatpush1.msra.mxu0 0.0
    %316 = vmatprep.mubr.f32.mxu0 0.0
    %317 = vmatmul.mubr.f32.gmra.mrb[0].mxu0 %v247
    %v318 = vpop.f32.mrb[0].mxu0
    %v319 = vadd.f32 %v251, %v318
    %v320 = vpop.f32.mrb[0].mxu0
    %321 = vdwg.mxu0
    %v322 = vmax.f32 %v319, 0.0
    %v323 = vlaneseq
    %v324 = vshrl.u32 %v323, 7
    %v325 = vsub.s32 0, %v324
    %v326 = vrot.slane %v93, %v325
    %327 = vmatprep.subr.mxu0 0.0
    %328 = vmatpush1.msra.mxu0 %v77
    %329 = vmatprep.subr.mxu0 0.0
    %330 = vmatpush1.msra.mxu0 %v78
    %331 = vmatprep.subr.mxu0 0.0
    %332 = vmatpush1.msra.mxu0 %v79
    %333 = vmatprep.subr.mxu0 0.0
    %334 = vmatpush1.msra.mxu0 %v80
    %335 = vmatprep.subr.mxu0 0.0
    %336 = vmatpush1.msra.mxu0 %v81
    %337 = vmatprep.subr.mxu0 0.0
    %338 = vmatpush1.msra.mxu0 %v82
    %339 = vmatprep.subr.mxu0 0.0
    %340 = vmatpush1.msra.mxu0 %v83
    %341 = vmatprep.subr.mxu0 0.0
    %342 = vmatpush1.msra.mxu0 %v84
    %343 = vmatprep.subr.mxu0 0.0
    %344 = vmatpush1.msra.mxu0 %v85
    %345 = vmatprep.subr.mxu0 0.0
    %346 = vmatpush1.msra.mxu0 %v86
    %347 = vmatprep.subr.mxu0 0.0
    %348 = vmatpush1.msra.mxu0 %v87
    %349 = vmatprep.subr.mxu0 0.0
    %350 = vmatpush1.msra.mxu0 %v88
    %351 = vmatprep.subr.mxu0 0.0
    %352 = vmatpush1.msra.mxu0 %v89
    %353 = vmatprep.subr.mxu0 0.0
    %354 = vmatpush1.msra.mxu0 %v90
    %355 = vmatprep.subr.mxu0 0.0
    %356 = vmatpush1.msra.mxu0 %v91
    %357 = vmatprep.subr.mxu0 0.0
    %358 = vmatpush1.msra.mxu0 %v92
    %359 = vmatprep.subr.mxu0 0.0
    %360 = vmatpush1.msra.mxu0 0.0
    %361 = vmatprep.subr.mxu0 0.0
    %362 = vmatpush1.msra.mxu0 0.0
    %363 = vmatprep.subr.mxu0 0.0
    %364 = vmatpush1.msra.mxu0 0.0
    %365 = vmatprep.subr.mxu0 0.0
    %366 = vmatpush1.msra.mxu0 0.0
    %367 = vmatprep.subr.mxu0 0.0
    %368 = vmatpush1.msra.mxu0 0.0
    %369 = vmatprep.subr.mxu0 0.0
    %370 = vmatpush1.msra.mxu0 0.0
    %371 = vmatprep.subr.mxu0 0.0
    %372 = vmatpush1.msra.mxu0 0.0
    %373 = vmatprep.subr.mxu0 0.0
    %374 = vmatpush1.msra.mxu0 0.0
    %375 = vmatprep.subr.mxu0 0.0
    %376 = vmatpush1.msra.mxu0 0.0
    %377 = vmatprep.subr.mxu0 0.0
    %378 = vmatpush1.msra.mxu0 0.0
    %379 = vmatprep.subr.mxu0 0.0
    %380 = vmatpush1.msra.mxu0 0.0
    %381 = vmatprep.subr.mxu0 0.0
    %382 = vmatpush1.msra.mxu0 0.0
    %383 = vmatprep.subr.mxu0 0.0
    %384 = vmatpush1.msra.mxu0 0.0
    %385 = vmatprep.subr.mxu0 0.0
    %386 = vmatpush1.msra.mxu0 0.0
    %387 = vmatprep.subr.mxu0 0.0
    %388 = vmatpush1.msra.mxu0 0.0
    %389 = vmatprep.subr.mxu0 0.0
    %390 = vmatpush1.msra.mxu0 0.0
    %391 = vmatprep.mubr.f32.mxu0 0.0
    %392 = vmatmul.mubr.f32.gmra.mrb[0].mxu0 %v322
    %v393 = vpop.f32.mrb[0].mxu0
    %v394 = vadd.f32 %v326, %v393
    %v395 = vpop.f32.mrb[0].mxu0
    %396 = vdwg.mxu0
    %v397 = vadd.f32 %v319, %v394
    %398 = vst [vmem:[%s2] sm:$0xff] %v397
    // Predicated region
    $region18: #{actor_critic_head.1} parent=1 // pred_check
      _
    $region19: #{actor_critic_head.1} parent=1 // pred_check_branch
      %400 = sbr.rel (0) target = $region21
    $region20: #{actor_critic_head.1} parent=1 // pred_region
      _
    $region21: #{actor_critic_head.1} parent=1 // pred_fallthru
      _
    // Predicated region
    $region22: #{actor_critic_head.1} parent=1 // pred_check
      _
    $region23: #{actor_critic_head.1} parent=1 // pred_check_branch
      %402 = sbr.rel (0) target = $region25
    $region24: #{actor_critic_head.1} parent=1 // pred_region
      _
    $region25: #{actor_critic_head.1} parent=1 // pred_fallthru
      _
    %403 = vsyncpa [#allocation3], 1
    %404 = vsyncpa [#allocation5], 1

</llo_original>
